<compile_context>
chip_gen: v7x
topology: tpu7x:2x2x1
jax: 0.10.0
libtpu: 0.0.40
codegen_flags: <defaults>
</compile_context>

<pallas_src>
import jax
import jax.numpy as jnp
from jax.experimental import pallas as pl
from jax.experimental.pallas import tpu as pltpu

HIDDEN = 64        # matches `hidden_size = 64` in the reference module
HIDDEN_PAD = 128   # lane-dense padded hidden size
VOCAB = 128        # synthetic input_lang.n_words


def encoder_gru_kernel(tok_ref,     # scalar-prefetch: (T,) int32 (consumed by index_maps)
                       emb_ref,     # (1, 1, HP)      gathered embedding row for step t
                       h0_ref,      # (1, HP)         initial hidden (resident)
                       w_ref,       # (2*HP, 4*HP)    fused [x;h] -> [r|z|gi_n|gh_n] weights
                       b_ref,       # (1, 4*HP)       fused bias
                       out_ref,     # (1, 1, HP)      per-step hidden output (block t)
                       h_scr):      # VMEM scratch (1, HP): recurrent hidden carry
    del tok_ref  # token already consumed by the embedding BlockSpec index_map
    HP = HIDDEN_PAD
    t = pl.program_id(0)

    @pl.when(t == 0)
    def _():
        h_scr[...] = h0_ref[...]

    x = emb_ref[...].reshape(1, HP)          # embedded token (f32, lane-dense)
    h = h_scr[...]                           # previous hidden

    # One fused MXU matmul: (1, 2*HP) @ (2*HP, 4*HP)
    xh = jnp.concatenate([x, h], axis=-1)
    g = jnp.dot(xh, w_ref[...], preferred_element_type=jnp.float32) + b_ref[...]

    r = jax.nn.sigmoid(g[:, 0 * HP:1 * HP])              # reset gate
    z = jax.nn.sigmoid(g[:, 1 * HP:2 * HP])              # update gate
    n = jnp.tanh(g[:, 2 * HP:3 * HP] + r * g[:, 3 * HP:4 * HP])
    h_new = n + z * (h - n)                  # == (1 - z) * n + z * h

    h_scr[...] = h_new
    out_ref[...] = h_new.reshape(1, 1, HP)


def prepare_params(params):
    """One-time padding / transposition / gate fusion of the PyTorch params."""
    H, HP = HIDDEN, HIDDEN_PAD
    emb = params["embedding"].astype(jnp.float32)          # (V, H)
    V = emb.shape[0]
    emb_p = jnp.zeros((V, 1, HP), jnp.float32).at[:, 0, :H].set(emb)

    wi_t = params["w_ih"].astype(jnp.float32).T             # (H, 3H), gates [r|z|n]
    wh_t = params["w_hh"].astype(jnp.float32).T              # (H, 3H)
    bi = params["b_ih"].astype(jnp.float32)                  # (3H,)
    bh = params["b_hh"].astype(jnp.float32)

    # Fused weight: rows [x(HP) ; h(HP)], columns [r | z | gi_n | gh_n] (HP each).
    w = jnp.zeros((2 * HP, 4 * HP), jnp.float32)
    w = w.at[:H, 0 * HP:0 * HP + H].set(wi_t[:, 0 * H:1 * H])   # x -> r
    w = w.at[:H, 1 * HP:1 * HP + H].set(wi_t[:, 1 * H:2 * H])   # x -> z
    w = w.at[:H, 2 * HP:2 * HP + H].set(wi_t[:, 2 * H:3 * H])   # x -> gi_n
    w = w.at[HP:HP + H, 0 * HP:0 * HP + H].set(wh_t[:, 0 * H:1 * H])  # h -> r
    w = w.at[HP:HP + H, 1 * HP:1 * HP + H].set(wh_t[:, 1 * H:2 * H])  # h -> z
    w = w.at[HP:HP + H, 3 * HP:3 * HP + H].set(wh_t[:, 2 * H:3 * H])  # h -> gh_n

    b = jnp.zeros((1, 4 * HP), jnp.float32)
    b = b.at[0, 0 * HP:0 * HP + H].set(bi[0 * H:1 * H] + bh[0 * H:1 * H])  # r
    b = b.at[0, 1 * HP:1 * HP + H].set(bi[1 * H:2 * H] + bh[1 * H:2 * H])  # z
    b = b.at[0, 2 * HP:2 * HP + H].set(bi[2 * H:3 * H])                    # gi_n bias
    b = b.at[0, 3 * HP:3 * HP + H].set(bh[2 * H:3 * H])                    # gh_n bias

    return {"emb": emb_p, "w": w, "b": b}


def encoder_rnn_sequence(tokens, hidden0, prep):
    """Run the encoder over a whole token sequence inside one pallas_call.

    tokens:  (T,) int32
    hidden0: (1, 1, H) float32
    returns (outputs, hidden): (T, 1, H) per-step GRU outputs, (1, 1, H) final hidden.
    """
    H, HP = HIDDEN, HIDDEN_PAD
    tokens = jnp.asarray(tokens, jnp.int32).reshape(-1)
    T = tokens.shape[0]
    h0 = jnp.zeros((1, HP), jnp.float32).at[0, :H].set(hidden0.reshape(H))

    grid_spec = pltpu.PrefetchScalarGridSpec(
        num_scalar_prefetch=1,
        grid=(T,),
        in_specs=[
            # embedding row gather via the scalar-prefetched token ids
            pl.BlockSpec((1, 1, HP), lambda t, tok: (tok[t], 0, 0)),
            # initial hidden / fused weights / fused bias: resident across steps
            pl.BlockSpec((1, HP), lambda t, tok: (0, 0)),
            pl.BlockSpec((2 * HP, 4 * HP), lambda t, tok: (0, 0)),
            pl.BlockSpec((1, 4 * HP), lambda t, tok: (0, 0)),
        ],
        out_specs=pl.BlockSpec((1, 1, HP), lambda t, tok: (t, 0, 0)),
        scratch_shapes=[pltpu.VMEM((1, HP), jnp.float32)],
    )

    out = pl.pallas_call(
        encoder_gru_kernel,
        out_shape=jax.ShapeDtypeStruct((T, 1, HP), jnp.float32),
        grid_spec=grid_spec,
        compiler_params=pltpu.CompilerParams(
            dimension_semantics=("arbitrary",)),   # recurrent time axis
    )(tokens, prep["emb"], h0, prep["w"], prep["b"])

    outputs = out[:, :, :H]          # (T, 1, H)  per-step GRU outputs
    hidden = out[T - 1:T, :, :H]     # (1, 1, H)  final hidden
    return outputs, hidden


def encoder_rnn_forward(token, hidden, prep):
    """Original module semantics: one token, seq_len=1, batch=1."""
    tok = jnp.asarray(token, jnp.int32).reshape(1)
    outputs, h_new = encoder_rnn_sequence(tok, hidden, prep)
    return outputs.reshape(1, 1, HIDDEN), h_new


def init_params(key):
    """Deterministic parameter init matching the module's shapes.

    NOTE: the reference uses an all-zeros pretrained embedding; random values
    are used here so the kernel exercises a non-trivial data path.
    """
    H = HIDDEN
    k_emb, k1, k2, k3, k4 = jax.random.split(key, 5)
    bound = 1.0 / jnp.sqrt(H)  # PyTorch GRU default init range
    return {
        "embedding": jax.random.normal(k_emb, (VOCAB, H), jnp.float32) * 0.1,
        "w_ih": jax.random.uniform(k1, (3 * H, H), jnp.float32, -bound, bound),
        "w_hh": jax.random.uniform(k2, (3 * H, H), jnp.float32, -bound, bound),
        "b_ih": jax.random.uniform(k3, (3 * H,), jnp.float32, -bound, bound),
        "b_hh": jax.random.uniform(k4, (3 * H,), jnp.float32, -bound, bound),
    }


def reference_step(tok, h, params):
    """Pure-JAX reference of nn.Embedding + nn.GRUCell math (PyTorch gate order)."""
    H = HIDDEN
    x = params["embedding"][tok].reshape(1, H)
    gi = x @ params["w_ih"].T + params["b_ih"]
    gh = h @ params["w_hh"].T + params["b_hh"]
    r = jax.nn.sigmoid(gi[:, :H] + gh[:, :H])
    z = jax.nn.sigmoid(gi[:, H:2 * H] + gh[:, H:2 * H])
    n = jnp.tanh(gi[:, 2 * H:] + r * gh[:, 2 * H:])
    return (1.0 - z) * n + z * h


def reference_sequence(tokens, hidden0, params):
    H = HIDDEN
    h = hidden0.reshape(1, H)
    outs = []
    for t in range(tokens.shape[0]):
        h = reference_step(int(tokens[t]), h, params)
        outs.append(h)
    return jnp.stack(outs).reshape(len(outs), 1, H), h.reshape(1, 1, H)


if __name__ == "__main__":
    key = jax.random.PRNGKey(0)
    params = init_params(key)
    prep = prepare_params(params)

    # Small example: a sequence of 8 word indices, zero initial hidden.
    tok_key = jax.random.fold_in(key, 17)
    tokens = jax.random.randint(tok_key, (8,), 0, VOCAB, dtype=jnp.int32)
    hidden0 = jnp.zeros((1, 1, HIDDEN), jnp.float32)  # EncoderRNN.initHidden()

    # Full-sequence kernel (time loop hoisted into the grid).
    outs, h_final = encoder_rnn_sequence(tokens, hidden0, prep)
    outs = jax.block_until_ready(outs)
    h_final = jax.block_until_ready(h_final)

    ref_outs, ref_h = reference_sequence(tokens, hidden0, params)
    assert outs.shape == (8, 1, HIDDEN) and h_final.shape == (1, 1, HIDDEN)
    assert jnp.allclose(outs, ref_outs, atol=1e-4), "sequence output mismatch vs reference"
    assert jnp.allclose(h_final, ref_h, atol=1e-4), "final hidden mismatch vs reference"

    # Original single-token forward(input, hidden) semantics (T == 1).
    out1, h1 = encoder_rnn_forward(jnp.int32(7), hidden0, prep)
    out1 = jax.block_until_ready(out1)
    ref_h1 = reference_step(7, hidden0.reshape(1, HIDDEN), params).reshape(1, 1, HIDDEN)
    assert out1.shape == (1, 1, HIDDEN) and h1.shape == (1, 1, HIDDEN)
    assert jnp.allclose(out1, ref_h1, atol=1e-4), "single-step output mismatch vs reference"
    assert jnp.allclose(h1, ref_h1, atol=1e-4), "single-step hidden mismatch vs reference"

    print("KERNEL_OK")
</pallas_src>

<mosaic_0001>
module attributes {stable_mosaic.version = 11 : i64} {
  func.func @encoder_gru_kernel(%arg0: i32, %arg1: memref<8xi32, #tpu.memory_space<smem>>, %arg2: memref<1x1x128xf32, #tpu.memory_space<vmem>>, %arg3: memref<1x128xf32, #tpu.memory_space<vmem>>, %arg4: memref<256x512xf32, #tpu.memory_space<vmem>>, %arg5: memref<1x512xf32, #tpu.memory_space<vmem>>, %arg6: memref<1x1x128xf32, #tpu.memory_space<vmem>>, %arg7: memref<1x128xf32, #tpu.memory_space<vmem>>) attributes {dimension_semantics = [#tpu.dimension_semantics<arbitrary>], iteration_bounds = array<i64: 8>, scalar_prefetch = 1 : i64, scratch_operands = 1 : i64, tpu.core_type = #tpu.core_type<tc>, window_params = [{transform_indices = @transform_0, window_bounds = array<i64: 1, 1, 128>}, {pipeline_mode = #tpu.pipeline_mode<synchronous>, transform_indices = @transform_1, window_bounds = array<i64: 1, 128>}, {pipeline_mode = #tpu.pipeline_mode<synchronous>, transform_indices = @transform_2, window_bounds = array<i64: 256, 512>}, {pipeline_mode = #tpu.pipeline_mode<synchronous>, transform_indices = @transform_3, window_bounds = array<i64: 1, 512>}, {transform_indices = @transform_4, window_bounds = array<i64: 1, 1, 128>}]} {
    %c0_i32 = arith.constant 0 : i32
    %0 = arith.cmpi eq, %arg0, %c0_i32 : i32
    %1 = arith.extui %0 : i1 to i32
    %c0_i32_0 = arith.constant 0 : i32
    %2 = arith.cmpi ne, %1, %c0_i32_0 : i32
    scf.if %2 {
      %c0_16 = arith.constant 0 : index
      %c0_17 = arith.constant 0 : index
      %34 = vector.load %arg3[%c0_16, %c0_17] : memref<1x128xf32, #tpu.memory_space<vmem>>, vector<1x128xf32>
      %c0_18 = arith.constant 0 : index
      %c0_19 = arith.constant 0 : index
      %35 = vector.load %arg7[%c0_18, %c0_19] : memref<1x128xf32, #tpu.memory_space<vmem>>, vector<1x128xf32>
      tpu.vector_store %arg7[%c0_18, %c0_19], %34 {strides = array<i32>} : memref<1x128xf32, #tpu.memory_space<vmem>>, vector<1x128xf32>,
    } else {
    }
    %c0 = arith.constant 0 : index
    %c0_1 = arith.constant 0 : index
    %c0_2 = arith.constant 0 : index
    %3 = vector.load %arg2[%c0, %c0_1, %c0_2] : memref<1x1x128xf32, #tpu.memory_space<vmem>>, vector<1x1x128xf32>
    %4 = vector.shape_cast %3 : vector<1x1x128xf32> to vector<1x128xf32>
    %c0_3 = arith.constant 0 : index
    %c0_4 = arith.constant 0 : index
    %5 = vector.load %arg7[%c0_3, %c0_4] : memref<1x128xf32, #tpu.memory_space<vmem>>, vector<1x128xf32>
    %6 = tpu.concatenate %4, %5 in 1 : vector<1x128xf32>, vector<1x128xf32> -> vector<1x256xf32>
    %c0_5 = arith.constant 0 : index
    %c0_6 = arith.constant 0 : index
    %7 = vector.load %arg4[%c0_5, %c0_6] : memref<256x512xf32, #tpu.memory_space<vmem>>, vector<256x512xf32>
    %cst = arith.constant dense<0.000000e+00> : vector<1x512xf32>
    %8 = tpu.matmul %6, %7, %cst {dimension_numbers = #tpu.dot_dimension_numbers<[1], [0], [0], [1], [0, 0, 1, 1], [], []>} : vector<1x256xf32>, vector<256x512xf32>, vector<1x512xf32> -> vector<1x512xf32>
    %c0_7 = arith.constant 0 : index
    %c0_8 = arith.constant 0 : index
    %9 = vector.load %arg5[%c0_7, %c0_8] : memref<1x512xf32, #tpu.memory_space<vmem>>, vector<1x512xf32>
    %10 = arith.addf %8, %9 : vector<1x512xf32>
    %11 = vector.extract_strided_slice %10 {offsets = [0, 0], sizes = [1, 128], strides = [1, 1]} : vector<1x512xf32> to vector<1x128xf32>
    %12 = arith.negf %11 : vector<1x128xf32>
    %13 = math.exp %12 : vector<1x128xf32>
    %cst_9 = arith.constant 1.000000e+00 : f32
    %14 = vector.broadcast %cst_9 : f32 to vector<1x128xf32>
    %15 = arith.addf %14, %13 : vector<1x128xf32>
    %16 = arith.divf %14, %15 : vector<1x128xf32>
    %17 = vector.extract_strided_slice %10 {offsets = [0, 128], sizes = [1, 128], strides = [1, 1]} : vector<1x512xf32> to vector<1x128xf32>
    %18 = arith.negf %17 : vector<1x128xf32>
    %19 = math.exp %18 : vector<1x128xf32>
    %cst_10 = arith.constant 1.000000e+00 : f32
    %20 = vector.broadcast %cst_10 : f32 to vector<1x128xf32>
    %21 = arith.addf %20, %19 : vector<1x128xf32>
    %22 = arith.divf %20, %21 : vector<1x128xf32>
    %23 = vector.extract_strided_slice %10 {offsets = [0, 256], sizes = [1, 128], strides = [1, 1]} : vector<1x512xf32> to vector<1x128xf32>
    %24 = vector.extract_strided_slice %10 {offsets = [0, 384], sizes = [1, 128], strides = [1, 1]} : vector<1x512xf32> to vector<1x128xf32>
    %25 = arith.mulf %16, %24 : vector<1x128xf32>
    %26 = arith.addf %23, %25 : vector<1x128xf32>
    %27 = math.tanh %26 : vector<1x128xf32>
    %28 = arith.subf %5, %27 : vector<1x128xf32>
    %29 = arith.mulf %22, %28 : vector<1x128xf32>
    %30 = arith.addf %27, %29 : vector<1x128xf32>
    %c0_11 = arith.constant 0 : index
    %c0_12 = arith.constant 0 : index
    %31 = vector.load %arg7[%c0_11, %c0_12] : memref<1x128xf32, #tpu.memory_space<vmem>>, vector<1x128xf32>
    tpu.vector_store %arg7[%c0_11, %c0_12], %30 {strides = array<i32>} : memref<1x128xf32, #tpu.memory_space<vmem>>, vector<1x128xf32>,
    %32 = vector.shape_cast %30 : vector<1x128xf32> to vector<1x1x128xf32>
    %c0_13 = arith.constant 0 : index
    %c0_14 = arith.constant 0 : index
    %c0_15 = arith.constant 0 : index
    %33 = vector.load %arg6[%c0_13, %c0_14, %c0_15] : memref<1x1x128xf32, #tpu.memory_space<vmem>>, vector<1x1x128xf32>
    tpu.vector_store %arg6[%c0_13, %c0_14, %c0_15], %32 {strides = array<i32>} : memref<1x1x128xf32, #tpu.memory_space<vmem>>, vector<1x1x128xf32>,
    return
  }
  func.func @transform_0(%arg0: i32, %arg1: memref<8xi32, #tpu.memory_space<smem>>) -> (i32, i32, i32) {
    %0 = arith.index_cast %arg0 : i32 to index
    %1 = memref.load %arg1[%0] : memref<8xi32, #tpu.memory_space<smem>>
    %c0_i32 = arith.constant 0 : i32
    %c0_i32_0 = arith.constant 0 : i32
    %c0_i32_1 = arith.constant 0 : i32
    return %1, %c0_i32, %c0_i32_0 : i32, i32, i32
  }
  func.func @transform_1(%arg0: i32, %arg1: memref<8xi32, #tpu.memory_space<smem>>) -> (i32, i32) {
    %c0_i32 = arith.constant 0 : i32
    %c0_i32_0 = arith.constant 0 : i32
    %c0_i32_1 = arith.constant 0 : i32
    return %c0_i32, %c0_i32_0 : i32, i32
  }
  func.func @transform_2(%arg0: i32, %arg1: memref<8xi32, #tpu.memory_space<smem>>) -> (i32, i32) {
    %c0_i32 = arith.constant 0 : i32
    %c0_i32_0 = arith.constant 0 : i32
    %c0_i32_1 = arith.constant 0 : i32
    return %c0_i32, %c0_i32_0 : i32, i32
  }
  func.func @transform_3(%arg0: i32, %arg1: memref<8xi32, #tpu.memory_space<smem>>) -> (i32, i32) {
    %c0_i32 = arith.constant 0 : i32
    %c0_i32_0 = arith.constant 0 : i32
    %c0_i32_1 = arith.constant 0 : i32
    return %c0_i32, %c0_i32_0 : i32, i32
  }
  func.func @transform_4(%arg0: i32, %arg1: memref<8xi32, #tpu.memory_space<smem>>) -> (i32, i32, i32) {
    %c0_i32 = arith.constant 0 : i32
    %c0_i32_0 = arith.constant 0 : i32
    %c0_i32_1 = arith.constant 0 : i32
    return %arg0, %c0_i32, %c0_i32_0 : i32, i32, i32
  }
}

</mosaic_0001>

<llo_original>
// kernel: tpu_custom_call.1
$region0: #{tpu_custom_call.1}
  #allocation0 [shape = 'u32[]', space=smem, size = 0x4, offset = 0x4, fixed_abs, tag = 'smem constant byte address 0x4 - core index']
  #allocation1 [shape = 'u32[144,128]{1,0:T(1,128)}', space=vmem, size = 0x12000, scoped, tag = 'internal scratch']
  #allocation2 [shape = 'f32[1,128]{1,0:T(1,128)}', space=vmem, size = 0x200, scoped, tag = 'scratch operand']
  #allocation3 [shape = 's32[1]{0}', space=sflag, size = 0x4, scoped, tag = 'scoped memory for tpu_custom_call.1']
  #allocation4 [shape = 'u8[512]{0}', space=smem, size = 0x200, scoped, tag = 'prefetched SMEM operand 0']
  %s0 = inlined_call_operand.hbm [shape: s32[8], index: 0, kind: input, shape index: {}]
  %s1 = inlined_call_operand.hbm [shape: f32[128,1,128], index: 1, kind: input, shape index: {}]
  %s2 = inlined_call_operand.vmem [shape: f32[1,128], index: 2, kind: input, shape index: {}]
  %s3 = inlined_call_operand.hbm [shape: f32[256,512], index: 3, kind: input, shape index: {}]
  %s4 = inlined_call_operand.vmem [shape: f32[1,512], index: 4, kind: input, shape index: {}]
  %s5 = inlined_call_operand.hbm [shape: f32[8,1,128], index: 5, kind: output, shape index: {}]
  %s6 = sld [smem:[#allocation0]]
  $region61: #{tpu_custom_call.1} parent=0
    _
  %s8 = ssub.s32 1, %s6
  %s9 = scalar_select 0, %s8, %s6
  %11 = dma.hbm_to_smem %s0, 16, [#allocation4], [#allocation3]
  %12 = dma.done [#allocation3], 16
  %13 = sfence
  $region1: #{tpu_custom_call.1} parent=0
    #allocation5 [shape = 'u8[1024]{0}', space=vmem, size = 0x400, scoped, tag = 'input window, operand 1']
    #allocation6 [shape = 's32[2]{0}', space=sflag, size = 0x8, scoped, tag = 'scoped memory for tpu_custom_call.1']
    #allocation7 [shape = 's32[2]{0}', space=sflag, size = 0x8, scoped, tag = 'scoped memory for tpu_custom_call.1']
    #allocation8 [shape = 'u8[524288]{0}', space=vmem, size = 0x80000, scoped, tag = 'input window, operand 3, single buffered']
    #allocation9 [shape = 's32[1]{0}', space=sflag, size = 0x4, scoped, tag = 'scoped memory for tpu_custom_call.1']
    #allocation10 [shape = 'u8[1024]{0}', space=vmem, size = 0x400, scoped, tag = 'output window, operand 0']
    %14 = vsyncpa [#allocation6], 0
    %s15 = scalar_lea.sflag [#allocation6], 1
    %16 = vsyncpa %s15, 0
    %17 = vsyncpa [#allocation9], 0
    %18 = vsyncpa [#allocation7], 0
    %s19 = scalar_lea.sflag [#allocation7], 1
    %20 = vsyncpa %s19, 0
    loop: start=0, step=1, limit=10
    $region2: #{tpu_custom_call.1} parent=1 // loop_pre_header
      _
    $region3: #{tpu_custom_call.1} parent=1 // loop_header
      %s22 = sphi 0, %s26
      %p23 = scmp.ge.s32.totalorder %s22, 10
      %s34 = sphi 0, %s36
      %s37 = sphi 0, %s34
      %s38 = sphi 0, %s37
      %s54 = sphi 0, %s38
      %s58 = sphi 0, %s58
      %s60 = sphi 0, %s58
      %s61 = sphi 0, %s60
      %s75 = sphi 0, %s61
      %s79 = sphi 0, %s79
      %s81 = sphi 0, %s79
      %s82 = sphi 0, %s81
      %s96 = sphi 0, %s82
      %s100 = sphi 0, %s100
      %s102 = sphi 0, %s100
      %s103 = sphi 0, %s102
      %s117 = sphi 0, %s103
      %s123 = sphi 0, %s125
      %s126 = sphi 0, %s123
      %s127 = sphi 0, %s126
      %s143 = sphi 0, %s127
    $region4: #{tpu_custom_call.1} parent=1 // loop_header_branch
      %25 = sbr.rel (%p23) target = $region8
    $region5: #{tpu_custom_call.1} parent=1 // loop_body
      %s27 = ssub.s32 %s22, 1
      %s28 = ssub.s32 %s22, 2
      %s29 = sadd.s32 %s22, 1
      %s30 = sld [smem:[#allocation4 + %s22]]
      %s31 = sld [smem:[#allocation4 + %s29]]
      %s32 = ssub.s32 %s30, %s31
      %p33 = scmp.eq.s32.totalorder %s32, 0
      %s35 = sadd.s32 %s34, 1
      %s36 = scalar_select %p33, %s34, %s35
      %p39 = pneg %p33
      %p40 = scmp.eq.s32.totalorder %s22, 7
      %p41 = por %p39, %p40
      %p42 = scmp.ne.s32.totalorder %s34, %s37
      %p43 = scmp.eq.s32.totalorder %s22, 0
      %p44 = por %p42, %p43
      %p45 = scmp.ne.s32.totalorder %s34, %s37
      %p46 = scmp.eq.s32.totalorder %s27, 7
      %p47 = por %p45, %p46
      %p48 = scmp.ne.s32.totalorder %s37, %s38
      %p49 = scmp.eq.s32.totalorder %s27, 0
      %p50 = por %p48, %p49
      %p51 = scmp.ne.s32.totalorder %s37, %s38
      %p52 = scmp.eq.s32.totalorder %s28, 7
      %p53 = por %p51, %p52
      %p55 = scmp.ne.s32.totalorder %s38, %s54
      %p56 = scmp.eq.s32.totalorder %s28, 0
      %p57 = por %p55, %p56
      %s59 = sadd.s32 %s58, 1
      %p62 = scmp.eq.s32.totalorder %s22, 7
      %p63 = scmp.ne.s32.totalorder %s58, %s60
      %p64 = scmp.eq.s32.totalorder %s22, 0
      %p65 = por %p63, %p64
      %p66 = scmp.ne.s32.totalorder %s58, %s60
      %p67 = scmp.eq.s32.totalorder %s27, 7
      %p68 = por %p66, %p67
      %p69 = scmp.ne.s32.totalorder %s60, %s61
      %p70 = scmp.eq.s32.totalorder %s27, 0
      %p71 = por %p69, %p70
      %p72 = scmp.ne.s32.totalorder %s60, %s61
      %p73 = scmp.eq.s32.totalorder %s28, 7
      %p74 = por %p72, %p73
      %p76 = scmp.ne.s32.totalorder %s61, %s75
      %p77 = scmp.eq.s32.totalorder %s28, 0
      %p78 = por %p76, %p77
      %s80 = sadd.s32 %s79, 1
      %p83 = scmp.eq.s32.totalorder %s22, 7
      %p84 = scmp.ne.s32.totalorder %s79, %s81
      %p85 = scmp.eq.s32.totalorder %s22, 0
      %p86 = por %p84, %p85
      %p87 = scmp.ne.s32.totalorder %s79, %s81
      %p88 = scmp.eq.s32.totalorder %s27, 7
      %p89 = por %p87, %p88
      %p90 = scmp.ne.s32.totalorder %s81, %s82
      %p91 = scmp.eq.s32.totalorder %s27, 0
      %p92 = por %p90, %p91
      %p93 = scmp.ne.s32.totalorder %s81, %s82
      %p94 = scmp.eq.s32.totalorder %s28, 7
      %p95 = por %p93, %p94
      %p97 = scmp.ne.s32.totalorder %s82, %s96
      %p98 = scmp.eq.s32.totalorder %s28, 0
      %p99 = por %p97, %p98
      %s101 = sadd.s32 %s100, 1
      %p104 = scmp.eq.s32.totalorder %s22, 7
      %p105 = scmp.ne.s32.totalorder %s100, %s102
      %p106 = scmp.eq.s32.totalorder %s22, 0
      %p107 = por %p105, %p106
      %p108 = scmp.ne.s32.totalorder %s100, %s102
      %p109 = scmp.eq.s32.totalorder %s27, 7
      %p110 = por %p108, %p109
      %p111 = scmp.ne.s32.totalorder %s102, %s103
      %p112 = scmp.eq.s32.totalorder %s27, 0
      %p113 = por %p111, %p112
      %p114 = scmp.ne.s32.totalorder %s102, %s103
      %p115 = scmp.eq.s32.totalorder %s28, 7
      %p116 = por %p114, %p115
      %p118 = scmp.ne.s32.totalorder %s103, %s117
      %p119 = scmp.eq.s32.totalorder %s28, 0
      %p120 = por %p118, %p119
      %s121 = ssub.s32 %s22, %s29
      %p122 = scmp.eq.s32.totalorder %s121, 0
      %s124 = sadd.s32 %s123, 1
      %s125 = scalar_select %p122, %s123, %s124
      %p128 = pneg %p122
      %p129 = scmp.eq.s32.totalorder %s22, 7
      %p130 = por %p128, %p129
      %p131 = scmp.ne.s32.totalorder %s123, %s126
      %p132 = scmp.eq.s32.totalorder %s22, 0
      %p133 = por %p131, %p132
      %p134 = scmp.ne.s32.totalorder %s123, %s126
      %p135 = scmp.eq.s32.totalorder %s27, 7
      %p136 = por %p134, %p135
      %p137 = scmp.ne.s32.totalorder %s126, %s127
      %p138 = scmp.eq.s32.totalorder %s27, 0
      %p139 = por %p137, %p138
      %p140 = scmp.ne.s32.totalorder %s126, %s127
      %p141 = scmp.eq.s32.totalorder %s28, 7
      %p142 = por %p140, %p141
      %p144 = scmp.ne.s32.totalorder %s127, %s143
      %p145 = scmp.eq.s32.totalorder %s28, 0
      %p146 = por %p144, %p145
      %p147 = scmp.le.s32.totalorder 1, %s22
      %p148 = scmp.lt.s32.totalorder %s22, 9
      %p149 = pnand %p147, %p148
      %p150 = pneg %p149
      // Predicated region
      $region9: #{tpu_custom_call.1} parent=5 // pred_check
        _
      $region10: #{tpu_custom_call.1} parent=5 // pred_check_branch
        %152 = sbr.rel (%p149) target = $region12
      $region11: #{tpu_custom_call.1} parent=5 // pred_region
        %s153 = ssub.s32 %s22, 1
        // Predicated region
        $region13: #{tpu_custom_call.1} parent=11 // pred_check
          %p154 = pneg %p71
        $region14: #{tpu_custom_call.1} parent=11 // pred_check_branch
          %156 = sbr.rel (%p154) target = $region16
        $region15: #{tpu_custom_call.1} parent=11 // pred_region
          _
        $region16: #{tpu_custom_call.1} parent=11 // pred_fallthru
          _
        // Predicated region
        $region17: #{tpu_custom_call.1} parent=11 // pred_check
          %p157 = pneg %p92
        $region18: #{tpu_custom_call.1} parent=11 // pred_check_branch
          %159 = sbr.rel (%p157) target = $region20
        $region19: #{tpu_custom_call.1} parent=11 // pred_region
          %s161 = ssub.s32 16384, 16384
          %162 = vsyncadd [#allocation9], %s161
          %s163 = sshll.u32 [#allocation8], 4
          %s164 = int_to_ptr.vmem [resolvable:$true] %s163
          %169 = dma.hbm_to_vmem [thread:$0]  %s3, 16384, %s164, [#allocation9], 512, 512, 32
        $region20: #{tpu_custom_call.1} parent=11 // pred_fallthru
          _
        // Predicated region
        $region21: #{tpu_custom_call.1} parent=11 // pred_check
          %p170 = pneg %p113
        $region22: #{tpu_custom_call.1} parent=11 // pred_check_branch
          %172 = sbr.rel (%p170) target = $region24
        $region23: #{tpu_custom_call.1} parent=11 // pred_region
          _
        $region24: #{tpu_custom_call.1} parent=11 // pred_fallthru
          _
      $region12: #{tpu_custom_call.1} parent=5 // pred_fallthru
        _
      %p173 = scmp.lt.s32.totalorder %s22, 8
      // Predicated region
      $region25: #{tpu_custom_call.1} parent=5 // pred_check
        %p174 = pneg %p173
      $region26: #{tpu_custom_call.1} parent=5 // pred_check_branch
        %176 = sbr.rel (%p174) target = $region28
      $region27: #{tpu_custom_call.1} parent=5 // pred_region
        // Predicated region
        $region29: #{tpu_custom_call.1} parent=27 // pred_check
          %p177 = pneg %p44
        $region30: #{tpu_custom_call.1} parent=27 // pred_check_branch
          %179 = sbr.rel (%p177) target = $region32
        $region31: #{tpu_custom_call.1} parent=27 // pred_region
          %s180 = sand.u32 %s34, 1
          %s181 = scalar_lea.sflag [#allocation6], %s180
          %s182 = sand.u32 %s34, 1
          %s183 = scalar_lea.vmem [#allocation5], %s182
          %s184 = sld [smem:[#allocation4 + %s22]]
          %s186 = ssub.s32 16, 16
          %187 = vsyncadd %s181, %s186
          %s188 = smul.addr %s184, 16
          %s189 = scalar_lea.hbm %s1, %s188
          %s191 = sshll.u32 %s183, 4
          %s192 = int_to_ptr.vmem [resolvable:$true] %s191
          %194 = dma.hbm_to_vmem [thread:$0]  %s189, 16, %s192, %s181
        $region32: #{tpu_custom_call.1} parent=27 // pred_fallthru
          _
      $region28: #{tpu_custom_call.1} parent=5 // pred_fallthru
        _
      %p195 = scmp.le.s32.totalorder 1, %s22
      %p196 = scmp.lt.s32.totalorder %s22, 9
      %p197 = pnand %p195, %p196
      %p198 = pneg %p197
      // Predicated region
      $region33: #{tpu_custom_call.1} parent=5 // pred_check
        _
      $region34: #{tpu_custom_call.1} parent=5 // pred_check_branch
        %200 = sbr.rel (%p197) target = $region36
      $region35: #{tpu_custom_call.1} parent=5 // pred_region
        %s201 = ssub.s32 %s22, 1
        %s202 = sand.u32 %s37, 1
        %s203 = scalar_lea.sflag [#allocation6], %s202
        %s204 = sand.u32 %s37, 1
        %s205 = scalar_lea.vmem [#allocation5], %s204
        // Predicated region
        $region37: #{tpu_custom_call.1} parent=35 // pred_check
          %p206 = pneg %p50
        $region38: #{tpu_custom_call.1} parent=35 // pred_check_branch
          %208 = sbr.rel (%p206) target = $region40
        $region39: #{tpu_custom_call.1} parent=35 // pred_region
          %209 = dma.done %s203, 16
        $region40: #{tpu_custom_call.1} parent=35 // pred_fallthru
          _
        // Predicated region
        $region41: #{tpu_custom_call.1} parent=35 // pred_check
          %p210 = pneg %p92
        $region42: #{tpu_custom_call.1} parent=35 // pred_check_branch
          %212 = sbr.rel (%p210) target = $region44
        $region43: #{tpu_custom_call.1} parent=35 // pred_region
          %213 = dma.done [#allocation9], 16384
        $region44: #{tpu_custom_call.1} parent=35 // pred_fallthru
          _
        %s214 = sand.u32 %s37, 1
        %s215 = scalar_lea.sflag [#allocation6], %s214
        %s216 = sand.u32 %s37, 1
        %s217 = scalar_lea.vmem [#allocation5], %s216
        %p218 = pneg %p50
        %p219 = pneg %p47
        %p220 = pneg %p71
        %p221 = pneg %p68
        %p222 = pneg %p92
        %p223 = pneg %p89
        %p224 = pneg %p113
        %p225 = pneg %p110
        %p226 = pneg %p139
        %p227 = pneg %p136
        %s228 = sand.u32 %s126, 1
        %s229 = scalar_lea.sflag [#allocation7], %s228
        %s230 = sand.u32 %s126, 1
        %s231 = scalar_lea.vmem [#allocation10], %s230
        %s232 = sld [smem:[#allocation4 + %s27]]
        %p233 = scmp.eq.s32.totalorder %s27, 0
        // Predicated region
        $region45: #{tpu_custom_call.1} parent=35 // pred_check
          %p234 = pneg %p233
        $region46: #{tpu_custom_call.1} parent=35 // pred_check_branch
          %236 = sbr.rel (%p234) target = $region48
        $region47: #{tpu_custom_call.1} parent=35 // pred_region
          %v237 = vld [vmem:[%s2] sm:$0x1]
          %238 = vst [vmem:[#allocation2] sm:$0x1] %v237
        $region48: #{tpu_custom_call.1} parent=35 // pred_fallthru
          _
        %v239 = vld [vmem:[%s205] sm:$0x1]
        %v240 = vld [vmem:[#allocation2] sm:$0x1]
        %v241 = vld [vmem:[#allocation8] sm:$0xff]
        %v242 = vld [vmem:[#allocation8 + $0x8] sm:$0xff]
        %v243 = vld [vmem:[#allocation8 + $0x10] sm:$0xff]
        %v244 = vld [vmem:[#allocation8 + $0x18] sm:$0xff]
        %v245 = vld [vmem:[#allocation8 + $0x20] sm:$0xff]
        %v246 = vld [vmem:[#allocation8 + $0x28] sm:$0xff]
        %v247 = vld [vmem:[#allocation8 + $0x30] sm:$0xff]
        %v248 = vld [vmem:[#allocation8 + $0x38] sm:$0xff]
        %v249 = vld [vmem:[#allocation8 + $0x40] sm:$0xff]
        %v250 = vld [vmem:[#allocation8 + $0x48] sm:$0xff]
        %v251 = vld [vmem:[#allocation8 + $0x50] sm:$0xff]
        %v252 = vld [vmem:[#allocation8 + $0x58] sm:$0xff]
        %v253 = vld [vmem:[#allocation8 + $0x60] sm:$0xff]
        %v254 = vld [vmem:[#allocation8 + $0x68] sm:$0xff]
        %v255 = vld [vmem:[#allocation8 + $0x70] sm:$0xff]
        %v256 = vld [vmem:[#allocation8 + $0x78] sm:$0xff]
        %v257 = vld [vmem:[#allocation8 + $0x80] sm:$0xff]
        %v258 = vld [vmem:[#allocation8 + $0x88] sm:$0xff]
        %v259 = vld [vmem:[#allocation8 + $0x90] sm:$0xff]
        %v260 = vld [vmem:[#allocation8 + $0x98] sm:$0xff]
        %v261 = vld [vmem:[#allocation8 + $0xa0] sm:$0xff]
        %v262 = vld [vmem:[#allocation8 + $0xa8] sm:$0xff]
        %v263 = vld [vmem:[#allocation8 + $0xb0] sm:$0xff]
        %v264 = vld [vmem:[#allocation8 + $0xb8] sm:$0xff]
        %v265 = vld [vmem:[#allocation8 + $0xc0] sm:$0xff]
        %v266 = vld [vmem:[#allocation8 + $0xc8] sm:$0xff]
        %v267 = vld [vmem:[#allocation8 + $0xd0] sm:$0xff]
        %v268 = vld [vmem:[#allocation8 + $0xd8] sm:$0xff]
        %v269 = vld [vmem:[#allocation8 + $0xe0] sm:$0xff]
        %v270 = vld [vmem:[#allocation8 + $0xe8] sm:$0xff]
        %v271 = vld [vmem:[#allocation8 + $0xf0] sm:$0xff]
        %v272 = vld [vmem:[#allocation8 + $0xf8] sm:$0xff]
        %v273 = vld [vmem:[#allocation8 + $0x100] sm:$0xff]
        %v274 = vld [vmem:[#allocation8 + $0x108] sm:$0xff]
        %v275 = vld [vmem:[#allocation8 + $0x110] sm:$0xff]
        %v276 = vld [vmem:[#allocation8 + $0x118] sm:$0xff]
        %v277 = vld [vmem:[#allocation8 + $0x120] sm:$0xff]
        %v278 = vld [vmem:[#allocation8 + $0x128] sm:$0xff]
        %v279 = vld [vmem:[#allocation8 + $0x130] sm:$0xff]
        %v280 = vld [vmem:[#allocation8 + $0x138] sm:$0xff]
        %v281 = vld [vmem:[#allocation8 + $0x140] sm:$0xff]
        %v282 = vld [vmem:[#allocation8 + $0x148] sm:$0xff]
        %v283 = vld [vmem:[#allocation8 + $0x150] sm:$0xff]
        %v284 = vld [vmem:[#allocation8 + $0x158] sm:$0xff]
        %v285 = vld [vmem:[#allocation8 + $0x160] sm:$0xff]
        %v286 = vld [vmem:[#allocation8 + $0x168] sm:$0xff]
        %v287 = vld [vmem:[#allocation8 + $0x170] sm:$0xff]
        %v288 = vld [vmem:[#allocation8 + $0x178] sm:$0xff]
        %v289 = vld [vmem:[#allocation8 + $0x180] sm:$0xff]
        %v290 = vld [vmem:[#allocation8 + $0x188] sm:$0xff]
        %v291 = vld [vmem:[#allocation8 + $0x190] sm:$0xff]
        %v292 = vld [vmem:[#allocation8 + $0x198] sm:$0xff]
        %v293 = vld [vmem:[#allocation8 + $0x1a0] sm:$0xff]
        %v294 = vld [vmem:[#allocation8 + $0x1a8] sm:$0xff]
        %v295 = vld [vmem:[#allocation8 + $0x1b0] sm:$0xff]
        %v296 = vld [vmem:[#allocation8 + $0x1b8] sm:$0xff]
        %v297 = vld [vmem:[#allocation8 + $0x1c0] sm:$0xff]
        %v298 = vld [vmem:[#allocation8 + $0x1c8] sm:$0xff]
        %v299 = vld [vmem:[#allocation8 + $0x1d0] sm:$0xff]
        %v300 = vld [vmem:[#allocation8 + $0x1d8] sm:$0xff]
        %v301 = vld [vmem:[#allocation8 + $0x1e0] sm:$0xff]
        %v302 = vld [vmem:[#allocation8 + $0x1e8] sm:$0xff]
        %v303 = vld [vmem:[#allocation8 + $0x1f0] sm:$0xff]
        %v304 = vld [vmem:[#allocation8 + $0x1f8] sm:$0xff]
        %v305 = vld [vmem:[#allocation8 + $0x200] sm:$0xff]
        %v306 = vld [vmem:[#allocation8 + $0x208] sm:$0xff]
        %v307 = vld [vmem:[#allocation8 + $0x210] sm:$0xff]
        %v308 = vld [vmem:[#allocation8 + $0x218] sm:$0xff]
        %v309 = vld [vmem:[#allocation8 + $0x220] sm:$0xff]
        %v310 = vld [vmem:[#allocation8 + $0x228] sm:$0xff]
        %v311 = vld [vmem:[#allocation8 + $0x230] sm:$0xff]
        %v312 = vld [vmem:[#allocation8 + $0x238] sm:$0xff]
        %v313 = vld [vmem:[#allocation8 + $0x240] sm:$0xff]
        %v314 = vld [vmem:[#allocation8 + $0x248] sm:$0xff]
        %v315 = vld [vmem:[#allocation8 + $0x250] sm:$0xff]
        %v316 = vld [vmem:[#allocation8 + $0x258] sm:$0xff]
        %v317 = vld [vmem:[#allocation8 + $0x260] sm:$0xff]
        %v318 = vld [vmem:[#allocation8 + $0x268] sm:$0xff]
        %v319 = vld [vmem:[#allocation8 + $0x270] sm:$0xff]
        %v320 = vld [vmem:[#allocation8 + $0x278] sm:$0xff]
        %v321 = vld [vmem:[#allocation8 + $0x280] sm:$0xff]
        %v322 = vld [vmem:[#allocation8 + $0x288] sm:$0xff]
        %v323 = vld [vmem:[#allocation8 + $0x290] sm:$0xff]
        %v324 = vld [vmem:[#allocation8 + $0x298] sm:$0xff]
        %v325 = vld [vmem:[#allocation8 + $0x2a0] sm:$0xff]
        %v326 = vld [vmem:[#allocation8 + $0x2a8] sm:$0xff]
        %v327 = vld [vmem:[#allocation8 + $0x2b0] sm:$0xff]
        %v328 = vld [vmem:[#allocation8 + $0x2b8] sm:$0xff]
        %v329 = vld [vmem:[#allocation8 + $0x2c0] sm:$0xff]
        %v330 = vld [vmem:[#allocation8 + $0x2c8] sm:$0xff]
        %v331 = vld [vmem:[#allocation8 + $0x2d0] sm:$0xff]
        %v332 = vld [vmem:[#allocation8 + $0x2d8] sm:$0xff]
        %v333 = vld [vmem:[#allocation8 + $0x2e0] sm:$0xff]
        %v334 = vld [vmem:[#allocation8 + $0x2e8] sm:$0xff]
        %v335 = vld [vmem:[#allocation8 + $0x2f0] sm:$0xff]
        %v336 = vld [vmem:[#allocation8 + $0x2f8] sm:$0xff]
        %v337 = vld [vmem:[#allocation8 + $0x300] sm:$0xff]
        %v338 = vld [vmem:[#allocation8 + $0x308] sm:$0xff]
        %v339 = vld [vmem:[#allocation8 + $0x310] sm:$0xff]
        %v340 = vld [vmem:[#allocation8 + $0x318] sm:$0xff]
        %v341 = vld [vmem:[#allocation8 + $0x320] sm:$0xff]
        %v342 = vld [vmem:[#allocation8 + $0x328] sm:$0xff]
        %v343 = vld [vmem:[#allocation8 + $0x330] sm:$0xff]
        %v344 = vld [vmem:[#allocation8 + $0x338] sm:$0xff]
        %v345 = vld [vmem:[#allocation8 + $0x340] sm:$0xff]
        %v346 = vld [vmem:[#allocation8 + $0x348] sm:$0xff]
        %v347 = vld [vmem:[#allocation8 + $0x350] sm:$0xff]
        %v348 = vld [vmem:[#allocation8 + $0x358] sm:$0xff]
        %v349 = vld [vmem:[#allocation8 + $0x360] sm:$0xff]
        %v350 = vld [vmem:[#allocation8 + $0x368] sm:$0xff]
        %v351 = vld [vmem:[#allocation8 + $0x370] sm:$0xff]
        %v352 = vld [vmem:[#allocation8 + $0x378] sm:$0xff]
        %v353 = vld [vmem:[#allocation8 + $0x380] sm:$0xff]
        %v354 = vld [vmem:[#allocation8 + $0x388] sm:$0xff]
        %v355 = vld [vmem:[#allocation8 + $0x390] sm:$0xff]
        %v356 = vld [vmem:[#allocation8 + $0x398] sm:$0xff]
        %v357 = vld [vmem:[#allocation8 + $0x3a0] sm:$0xff]
        %v358 = vld [vmem:[#allocation8 + $0x3a8] sm:$0xff]
        %v359 = vld [vmem:[#allocation8 + $0x3b0] sm:$0xff]
        %v360 = vld [vmem:[#allocation8 + $0x3b8] sm:$0xff]
        %v361 = vld [vmem:[#allocation8 + $0x3c0] sm:$0xff]
        %v362 = vld [vmem:[#allocation8 + $0x3c8] sm:$0xff]
        %v363 = vld [vmem:[#allocation8 + $0x3d0] sm:$0xff]
        %v364 = vld [vmem:[#allocation8 + $0x3d8] sm:$0xff]
        %v365 = vld [vmem:[#allocation8 + $0x3e0] sm:$0xff]
        %v366 = vld [vmem:[#allocation8 + $0x3e8] sm:$0xff]
        %v367 = vld [vmem:[#allocation8 + $0x3f0] sm:$0xff]
        %v368 = vld [vmem:[#allocation8 + $0x3f8] sm:$0xff]
        %v369 = vld [vmem:[%s4] sm:$0xf]
        %v371 = vlaneseq
        %v372 = vshrl.u32 %v371, 7
        %v373 = vsub.s32 0, %v372
        %v374 = vrot.slane %v369, %v373
        %v375 = vlaneseq
        %v376 = vshrl.u32 %v375, 7
        %v377 = vsub.s32 1, %v376
        %v378 = vrot.slane %v369, %v377
        %v379 = vlaneseq
        %v380 = vshrl.u32 %v379, 7
        %v381 = vsub.s32 2, %v380
        %v382 = vrot.slane %v369, %v381
        %v383 = vlaneseq
        %v384 = vshrl.u32 %v383, 7
        %v385 = vsub.s32 3, %v384
        %v386 = vrot.slane %v369, %v385
        %391 = vmatprep.subr.mxu0 %v242
        %392 = vmatpush1.msra.mxu0 %v241
        %393 = vmatprep.subr.mxu0 %v246
        %394 = vmatpush1.msra.mxu0 %v245
        %395 = vmatprep.subr.mxu0 %v250
        %396 = vmatpush1.msra.mxu0 %v249
        %397 = vmatprep.subr.mxu0 %v254
        %398 = vmatpush1.msra.mxu0 %v253
        %399 = vmatprep.subr.mxu0 %v258
        %400 = vmatpush1.msra.mxu0 %v257
        %401 = vmatprep.subr.mxu0 %v262
        %402 = vmatpush1.msra.mxu0 %v261
        %403 = vmatprep.subr.mxu0 %v266
        %404 = vmatpush1.msra.mxu0 %v265
        %405 = vmatprep.subr.mxu0 %v270
        %406 = vmatpush1.msra.mxu0 %v269
        %407 = vmatprep.subr.mxu0 %v274
        %408 = vmatpush1.msra.mxu0 %v273
        %409 = vmatprep.subr.mxu0 %v278
        %410 = vmatpush1.msra.mxu0 %v277
        %411 = vmatprep.subr.mxu0 %v282
        %412 = vmatpush1.msra.mxu0 %v281
        %413 = vmatprep.subr.mxu0 %v286
        %414 = vmatpush1.msra.mxu0 %v285
        %415 = vmatprep.subr.mxu0 %v290
        %416 = vmatpush1.msra.mxu0 %v289
        %417 = vmatprep.subr.mxu0 %v294
        %418 = vmatpush1.msra.mxu0 %v293
        %419 = vmatprep.subr.mxu0 %v298
        %420 = vmatpush1.msra.mxu0 %v297
        %421 = vmatprep.subr.mxu0 %v302
        %422 = vmatpush1.msra.mxu0 %v301
        %423 = vmatprep.subr.mxu0 %v306
        %424 = vmatpush1.msra.mxu0 %v305
        %425 = vmatprep.subr.mxu0 %v310
        %426 = vmatpush1.msra.mxu0 %v309
        %427 = vmatprep.subr.mxu0 %v314
        %428 = vmatpush1.msra.mxu0 %v313
        %429 = vmatprep.subr.mxu0 %v318
        %430 = vmatpush1.msra.mxu0 %v317
        %431 = vmatprep.subr.mxu0 %v322
        %432 = vmatpush1.msra.mxu0 %v321
        %433 = vmatprep.subr.mxu0 %v326
        %434 = vmatpush1.msra.mxu0 %v325
        %435 = vmatprep.subr.mxu0 %v330
        %436 = vmatpush1.msra.mxu0 %v329
        %437 = vmatprep.subr.mxu0 %v334
        %438 = vmatpush1.msra.mxu0 %v333
        %439 = vmatprep.subr.mxu0 %v338
        %440 = vmatpush1.msra.mxu0 %v337
        %441 = vmatprep.subr.mxu0 %v342
        %442 = vmatpush1.msra.mxu0 %v341
        %443 = vmatprep.subr.mxu0 %v346
        %444 = vmatpush1.msra.mxu0 %v345
        %445 = vmatprep.subr.mxu0 %v350
        %446 = vmatpush1.msra.mxu0 %v349
        %447 = vmatprep.subr.mxu0 %v354
        %448 = vmatpush1.msra.mxu0 %v353
        %449 = vmatprep.subr.mxu0 %v358
        %450 = vmatpush1.msra.mxu0 %v357
        %451 = vmatprep.subr.mxu0 %v362
        %452 = vmatpush1.msra.mxu0 %v361
        %453 = vmatprep.subr.mxu0 %v366
        %454 = vmatpush1.msra.mxu0 %v365
        %455 = vmatprep.mubr.f32.mxu0 %v240
        %456 = vmatmul.mubr.f32.gmra.mrb[0].mxu0 %v239
        %v457 = vpop.f32.mrb[0].mxu0
        %v458 = vadd.f32 %v374, %v457
        %v459 = vpop.f32.mrb[0].mxu0
        %v460 = vadd.f32 %v378, %v459
        %461 = vdwg.mxu0
        %462 = vmatprep.subr.mxu0 %v244
        %463 = vmatpush1.msra.mxu0 %v243
        %464 = vmatprep.subr.mxu0 %v248
        %465 = vmatpush1.msra.mxu0 %v247
        %466 = vmatprep.subr.mxu0 %v252
        %467 = vmatpush1.msra.mxu0 %v251
        %468 = vmatprep.subr.mxu0 %v256
        %469 = vmatpush1.msra.mxu0 %v255
        %470 = vmatprep.subr.mxu0 %v260
        %471 = vmatpush1.msra.mxu0 %v259
        %472 = vmatprep.subr.mxu0 %v264
        %473 = vmatpush1.msra.mxu0 %v263
        %474 = vmatprep.subr.mxu0 %v268
        %475 = vmatpush1.msra.mxu0 %v267
        %476 = vmatprep.subr.mxu0 %v272
        %477 = vmatpush1.msra.mxu0 %v271
        %478 = vmatprep.subr.mxu0 %v276
        %479 = vmatpush1.msra.mxu0 %v275
        %480 = vmatprep.subr.mxu0 %v280
        %481 = vmatpush1.msra.mxu0 %v279
        %482 = vmatprep.subr.mxu0 %v284
        %483 = vmatpush1.msra.mxu0 %v283
        %484 = vmatprep.subr.mxu0 %v288
        %485 = vmatpush1.msra.mxu0 %v287
        %486 = vmatprep.subr.mxu0 %v292
        %487 = vmatpush1.msra.mxu0 %v291
        %488 = vmatprep.subr.mxu0 %v296
        %489 = vmatpush1.msra.mxu0 %v295
        %490 = vmatprep.subr.mxu0 %v300
        %491 = vmatpush1.msra.mxu0 %v299
        %492 = vmatprep.subr.mxu0 %v304
        %493 = vmatpush1.msra.mxu0 %v303
        %494 = vmatprep.subr.mxu0 %v308
        %495 = vmatpush1.msra.mxu0 %v307
        %496 = vmatprep.subr.mxu0 %v312
        %497 = vmatpush1.msra.mxu0 %v311
        %498 = vmatprep.subr.mxu0 %v316
        %499 = vmatpush1.msra.mxu0 %v315
        %500 = vmatprep.subr.mxu0 %v320
        %501 = vmatpush1.msra.mxu0 %v319
        %502 = vmatprep.subr.mxu0 %v324
        %503 = vmatpush1.msra.mxu0 %v323
        %504 = vmatprep.subr.mxu0 %v328
        %505 = vmatpush1.msra.mxu0 %v327
        %506 = vmatprep.subr.mxu0 %v332
        %507 = vmatpush1.msra.mxu0 %v331
        %508 = vmatprep.subr.mxu0 %v336
        %509 = vmatpush1.msra.mxu0 %v335
        %510 = vmatprep.subr.mxu0 %v340
        %511 = vmatpush1.msra.mxu0 %v339
        %512 = vmatprep.subr.mxu0 %v344
        %513 = vmatpush1.msra.mxu0 %v343
        %514 = vmatprep.subr.mxu0 %v348
        %515 = vmatpush1.msra.mxu0 %v347
        %516 = vmatprep.subr.mxu0 %v352
        %517 = vmatpush1.msra.mxu0 %v351
        %518 = vmatprep.subr.mxu0 %v356
        %519 = vmatpush1.msra.mxu0 %v355
        %520 = vmatprep.subr.mxu0 %v360
        %521 = vmatpush1.msra.mxu0 %v359
        %522 = vmatprep.subr.mxu0 %v364
        %523 = vmatpush1.msra.mxu0 %v363
        %524 = vmatprep.subr.mxu0 %v368
        %525 = vmatpush1.msra.mxu0 %v367
        %526 = vmatprep.mubr.f32.mxu0 %v240
        %527 = vmatmul.mubr.f32.gmra.mrb[0].mxu0 %v239
        %v528 = vpop.f32.mrb[0].mxu0
        %v529 = vadd.f32 %v382, %v528
        %v530 = vpop.f32.mrb[0].mxu0
        %v531 = vadd.f32 %v386, %v530
        %532 = vdwg.mxu0
        %v533 = vxor.u32 %v458, 2147483648
        %v534 = vmul.f32 %v533, 1.442695
        %v535 = vpow.pop %v534
        %v536 = vadd.f32 %v535, 1.0
        %v537 = vrcp.pop %v536
        %v538 = vmul.f32 1.0, %v537
        %v539 = vxor.u32 %v460, 2147483648
        %v540 = vmul.f32 %v539, 1.442695
        %v541 = vpow.pop %v540
        %v542 = vadd.f32 %v541, 1.0
        %v543 = vrcp.pop %v542
        %v544 = vmul.f32 1.0, %v543
        %v545 = vmul.f32 %v538, %v531
        %v546 = vadd.f32 %v529, %v545
        %v547 = vtanh.pop %v546
        %v548 = vsub.f32 %v240, %v547
        %v549 = vmul.f32 %v544, %v548
        %v550 = vadd.f32 %v547, %v549
        %551 = vst [vmem:[#allocation2] sm:$0x1] %v550
        %552 = vst [vmem:[%s231] sm:$0x1] %v550
        %s553 = sand.u32 %s126, 1
        %s554 = scalar_lea.sflag [#allocation7], %s553
        %s555 = sand.u32 %s126, 1
        %s556 = scalar_lea.vmem [#allocation10], %s555
        // Predicated region
        $region49: #{tpu_custom_call.1} parent=35 // pred_check
          %p557 = pneg %p136
        $region50: #{tpu_custom_call.1} parent=35 // pred_check_branch
          %559 = sbr.rel (%p557) target = $region52
        $region51: #{tpu_custom_call.1} parent=35 // pred_region
          %s561 = ssub.s32 16, 16
          %562 = vsyncadd %s554, %s561
          %s563 = smul.addr %s27, 16
          %s564 = scalar_lea.hbm %s5, %s563
          %s566 = sshll.u32 %s556, 4
          %s567 = int_to_ptr.vmem [resolvable:$true] %s566
          %569 = dma.vmem_to_hbm [thread:$0]  %s567, 16, %s564, %s554
        $region52: #{tpu_custom_call.1} parent=35 // pred_fallthru
          _
      $region36: #{tpu_custom_call.1} parent=5 // pred_fallthru
        _
      %p570 = scmp.le.s32.totalorder 2, %s22
      // Predicated region
      $region53: #{tpu_custom_call.1} parent=5 // pred_check
        %p571 = pneg %p570
      $region54: #{tpu_custom_call.1} parent=5 // pred_check_branch
        %573 = sbr.rel (%p571) target = $region56
      $region55: #{tpu_custom_call.1} parent=5 // pred_region
        %s574 = ssub.s32 %s22, 2
        // Predicated region
        $region57: #{tpu_custom_call.1} parent=55 // pred_check
          %p575 = pneg %p142
        $region58: #{tpu_custom_call.1} parent=55 // pred_check_branch
          %577 = sbr.rel (%p575) target = $region60
        $region59: #{tpu_custom_call.1} parent=55 // pred_region
          %s578 = sand.u32 %s127, 1
          %s579 = scalar_lea.sflag [#allocation7], %s578
          %s580 = sand.u32 %s127, 1
          %s581 = scalar_lea.vmem [#allocation10], %s580
          %582 = dma.done %s579, 16
        $region60: #{tpu_custom_call.1} parent=55 // pred_fallthru
          _
      $region56: #{tpu_custom_call.1} parent=5 // pred_fallthru
        _
    $region6: #{tpu_custom_call.1} parent=1 // loop_footer
      %s26 = sadd.s32 1, %s22
    $region7: #{tpu_custom_call.1} parent=1 // loop_footer_branch
      %21 = sbr.rel target = $region3
    $region8: #{tpu_custom_call.1} parent=1 // loop_exit
      _
    %583 = vsyncpa [#allocation6], 1
    %s584 = scalar_lea.sflag [#allocation6], 1
    %585 = vsyncpa %s584, 1
    %586 = vsyncpa [#allocation9], 1
    %587 = vsyncpa [#allocation7], 1
    %s588 = scalar_lea.sflag [#allocation7], 1
    %589 = vsyncpa %s588, 1

</llo_original>
